<compile_context>
chip_gen: v7x
topology: tpu7x:2x2x1
jax: 0.10.0
libtpu: 0.0.40
codegen_flags: <defaults>
</compile_context>

<pallas_src>
import functools

import jax
import jax.numpy as jnp
from jax.experimental import pallas as pl
from jax.experimental.pallas import tpu as pltpu

EPS = 1e-05
LOG_CLAMP = -100.0  # PyTorch BCELoss clamps log terms at -100


def _round_up(x, m):
    return ((x + m - 1) // m) * m


def _row_align(dtype):
    # Sublane tiling: 8 rows for 4-byte, 16 for 2-byte, 32 for 1-byte dtypes.
    return max(8, 32 // jnp.dtype(dtype).itemsize)


def _dice_bce_partials_kernel(o_ref, t_ref, num_ref, den_ref, bce_ref, *,
                              s_total, ts, mask_lanes):
    o = o_ref[...].astype(jnp.float32)   # (r, ts)
    t = t_ref[...].astype(jnp.float32)   # (r, ts)

    if mask_lanes:
        # Ragged last S-chunk: zero out-of-range lanes BEFORE the logs so
        # garbage lanes cannot produce NaN/Inf that would poison row sums.
        lane = (jax.lax.broadcasted_iota(jnp.int32, o.shape, 1)
                + pl.program_id(1) * ts)
        ok = lane < s_total
        o = jnp.where(ok, o, 0.0)
        t = jnp.where(ok, t, 0.0)

    # Dice partial sums (den1 + den2 fused into a single lane reduction).
    num_ref[...] = jnp.sum(o * t, axis=1, keepdims=True)            # (r, 1)
    den_ref[...] = jnp.sum(o * o + t * t, axis=1, keepdims=True)    # (r, 1)

    # BCE: -(t*log(o) + (1-t)*log(1-o)) == -(log(1-o) + t*(log(o)-log(1-o)))
    # with each log clamped at -100 (PyTorch semantics).  Masked lanes give
    # exactly 0 (t=0, log(1-0)=0).
    log_o = jnp.maximum(jnp.log(o), LOG_CLAMP)
    log_1mo = jnp.maximum(jnp.log(1.0 - o), LOG_CLAMP)
    bce_ref[...] = -jnp.sum(log_1mo + t * (log_o - log_1mo),
                            axis=1, keepdims=True)                  # (r, 1)
    # Rows beyond NC in a ragged last row-block hold unspecified data; their
    # partials stay confined to those rows and are dropped in the wrapper.


def dice_plus_bce_loss(output, target, *, tile_bytes=2 * 1024 * 1024):
    """output, target: (N, C, D, H, W); output values in (0, 1)."""
    assert output.shape == target.shape
    n, c, d, h, w = output.shape
    nc = n * c
    s = d * h * w

    o2 = output.reshape(nc, s)
    t2 = target.reshape(nc, s)

    itemsize = max(jnp.dtype(output.dtype).itemsize,
                   jnp.dtype(target.dtype).itemsize)
    row_align = max(_row_align(output.dtype), _row_align(target.dtype))

    # Tile sizing: ~tile_bytes per input tile (x2 inputs x2 buffers in VMEM).
    tile_elems = max(row_align * 128, tile_bytes // itemsize)
    ts_cap = max(128, (tile_elems // row_align) // 128 * 128)
    ts = min(_round_up(s, 128), ts_cap)                       # lanes, %128
    r = min(_round_up(nc, row_align),
            max(row_align, (tile_elems // ts) // row_align * row_align))

    g_rows = pl.cdiv(nc, r)
    g_s = pl.cdiv(s, ts)

    kernel = functools.partial(
        _dice_bce_partials_kernel,
        s_total=s, ts=ts, mask_lanes=(s % ts != 0))

    part = jax.ShapeDtypeStruct((g_rows, g_s, r, 1), jnp.float32)
    out_spec = pl.BlockSpec((None, None, r, 1), lambda i, j: (i, j, 0, 0))

    num_p, den_p, bce_p = pl.pallas_call(
        kernel,
        out_shape=(part, part, part),
        grid_spec=pltpu.PrefetchScalarGridSpec(
            num_scalar_prefetch=0,
            grid=(g_rows, g_s),
            in_specs=[
                pl.BlockSpec((r, ts), lambda i, j: (i, j)),
                pl.BlockSpec((r, ts), lambda i, j: (i, j)),
            ],
            out_specs=(out_spec, out_spec, out_spec),
        ),
        compiler_params=pltpu.CompilerParams(
            dimension_semantics=("parallel", "parallel")),
    )(o2, t2)

    # Tiny final combine in plain XLA (O(nc_padded * g_s) elements).
    num_rows = num_p.sum(axis=1).reshape(g_rows * r)[:nc]
    den_rows = den_p.sum(axis=1).reshape(g_rows * r)[:nc]
    bce_rows = bce_p.sum(axis=1).reshape(g_rows * r)[:nc]

    dice = 2.0 * num_rows / (den_rows + EPS)
    dice_loss = jnp.mean(1.0 - dice)
    bce_loss = jnp.sum(bce_rows) / (nc * s)
    return dice_loss + bce_loss


def _reference(output, target):
    num = jnp.sum(output * target, axis=(2, 3, 4), keepdims=True)
    den1 = jnp.sum(output ** 2, axis=(2, 3, 4), keepdims=True)
    den2 = jnp.sum(target ** 2, axis=(2, 3, 4), keepdims=True)
    dice = 2.0 * num / (den1 + den2 + EPS)
    dice_loss = jnp.mean(1.0 - dice)
    log_o = jnp.maximum(jnp.log(output), LOG_CLAMP)
    log_1mo = jnp.maximum(jnp.log(1.0 - output), LOG_CLAMP)
    bce = jnp.mean(-(target * log_o + (1.0 - target) * log_1mo))
    return dice_loss + bce


if __name__ == "__main__":
    key = jax.random.PRNGKey(0)
    k1, k2 = jax.random.split(key)

    # Small but deliberately ragged shapes: NC = 10 rows, S = 2112 spatial
    # elements, so both ragged row-blocks and ragged S-chunks are exercised.
    n, c, d, h, w = 2, 5, 4, 16, 33
    output = jax.nn.sigmoid(
        jax.random.normal(k1, (n, c, d, h, w), dtype=jnp.float32))
    target = jax.random.bernoulli(k2, 0.5, (n, c, d, h, w)).astype(jnp.float32)

    ref = jax.block_until_ready(_reference(output, target))

    # Small tile budget -> 2x2 grid (multi-block + in-kernel masking paths).
    loss_small = jax.block_until_ready(
        dice_plus_bce_loss(output, target, tile_bytes=64 * 1024))
    # Default (production) tile budget -> single large block.
    loss_big = jax.block_until_ready(dice_plus_bce_loss(output, target))

    for v in (loss_small, loss_big):
        assert jnp.isfinite(v), "kernel produced non-finite loss"
        assert abs(float(v) - float(ref)) < 1e-4, (float(v), float(ref))
    print("KERNEL_OK")
</pallas_src>

<mosaic_0001>
module attributes {stable_mosaic.version = 11 : i64} {
  func.func @_dice_bce_partials_kernel(%arg0: i32, %arg1: i32, %arg2: memref<8x2048xf32, #tpu.memory_space<vmem>>, %arg3: memref<8x2048xf32, #tpu.memory_space<vmem>>, %arg4: memref<1x1x8x1xf32, #tpu.memory_space<vmem>>, %arg5: memref<1x1x8x1xf32, #tpu.memory_space<vmem>>, %arg6: memref<1x1x8x1xf32, #tpu.memory_space<vmem>>) attributes {dimension_semantics = [#tpu.dimension_semantics<parallel>, #tpu.dimension_semantics<parallel>], iteration_bounds = array<i64: 2, 2>, scalar_prefetch = 0 : i64, scratch_operands = 0 : i64, tpu.core_type = #tpu.core_type<tc>, window_params = [{transform_indices = @transform_0, window_bounds = array<i64: 8, 2048>}, {transform_indices = @transform_1, window_bounds = array<i64: 8, 2048>}, {transform_indices = @transform_2, window_bounds = array<i64: 1, 1, 8, 1>}, {transform_indices = @transform_3, window_bounds = array<i64: 1, 1, 8, 1>}, {transform_indices = @transform_4, window_bounds = array<i64: 1, 1, 8, 1>}]} {
    %c0 = arith.constant 0 : index
    %c0_0 = arith.constant 0 : index
    %0 = vector.load %arg2[%c0, %c0_0] : memref<8x2048xf32, #tpu.memory_space<vmem>>, vector<8x2048xf32>
    %c0_1 = arith.constant 0 : index
    %c0_2 = arith.constant 0 : index
    %1 = vector.load %arg3[%c0_1, %c0_2] : memref<8x2048xf32, #tpu.memory_space<vmem>>, vector<8x2048xf32>
    %2 = tpu.iota {dimensions = array<i32: 1>} : vector<8x2048xi32>
    %c2048_i32 = arith.constant 2048 : i32
    %3 = arith.muli %arg1, %c2048_i32 : i32
    %4 = vector.broadcast %3 : i32 to vector<8x2048xi32>
    %5 = arith.addi %2, %4 : vector<8x2048xi32>
    %c2112_i32 = arith.constant 2112 : i32
    %6 = vector.broadcast %c2112_i32 : i32 to vector<8x2048xi32>
    %7 = arith.cmpi slt, %5, %6 : vector<8x2048xi32>
    %cst = arith.constant 0.000000e+00 : f32
    %8 = vector.broadcast %cst : f32 to vector<8x2048xf32>
    %9 = arith.select %7, %0, %8 : vector<8x2048xi1>, vector<8x2048xf32>
    %cst_3 = arith.constant 0.000000e+00 : f32
    %10 = vector.broadcast %cst_3 : f32 to vector<8x2048xf32>
    %11 = arith.select %7, %1, %10 : vector<8x2048xi1>, vector<8x2048xf32>
    %12 = arith.mulf %9, %11 : vector<8x2048xf32>
    %cst_4 = arith.constant dense<0.000000e+00> : vector<8xf32>
    %13 = vector.multi_reduction <add>, %12, %cst_4 [1] : vector<8x2048xf32> to vector<8xf32>
    %14 = vector.shape_cast %13 : vector<8xf32> to vector<8x1xf32>
    %c0_5 = arith.constant 0 : index
    %c0_6 = arith.constant 0 : index
    %c0_7 = arith.constant 0 : index
    %c0_8 = arith.constant 0 : index
    %15 = vector.load %arg4[%c0_5, %c0_6, %c0_7, %c0_8] : memref<1x1x8x1xf32, #tpu.memory_space<vmem>>, vector<1x1x8x1xf32>
    %16 = vector.shape_cast %15 : vector<1x1x8x1xf32> to vector<8x1xf32>
    %17 = vector.shape_cast %14 : vector<8x1xf32> to vector<1x1x8x1xf32>
    tpu.vector_store %arg4[%c0_5, %c0_6, %c0_7, %c0_8], %17 {strides = array<i32>} : memref<1x1x8x1xf32, #tpu.memory_space<vmem>>, vector<1x1x8x1xf32>,
    %18 = arith.mulf %9, %9 : vector<8x2048xf32>
    %19 = arith.mulf %11, %11 : vector<8x2048xf32>
    %20 = arith.addf %18, %19 : vector<8x2048xf32>
    %cst_9 = arith.constant dense<0.000000e+00> : vector<8xf32>
    %21 = vector.multi_reduction <add>, %20, %cst_9 [1] : vector<8x2048xf32> to vector<8xf32>
    %22 = vector.shape_cast %21 : vector<8xf32> to vector<8x1xf32>
    %c0_10 = arith.constant 0 : index
    %c0_11 = arith.constant 0 : index
    %c0_12 = arith.constant 0 : index
    %c0_13 = arith.constant 0 : index
    %23 = vector.load %arg5[%c0_10, %c0_11, %c0_12, %c0_13] : memref<1x1x8x1xf32, #tpu.memory_space<vmem>>, vector<1x1x8x1xf32>
    %24 = vector.shape_cast %23 : vector<1x1x8x1xf32> to vector<8x1xf32>
    %25 = vector.shape_cast %22 : vector<8x1xf32> to vector<1x1x8x1xf32>
    tpu.vector_store %arg5[%c0_10, %c0_11, %c0_12, %c0_13], %25 {strides = array<i32>} : memref<1x1x8x1xf32, #tpu.memory_space<vmem>>, vector<1x1x8x1xf32>,
    %26 = math.log %9 : vector<8x2048xf32>
    %cst_14 = arith.constant -1.000000e+02 : f32
    %27 = vector.broadcast %cst_14 : f32 to vector<8x2048xf32>
    %28 = arith.maximumf %26, %27 : vector<8x2048xf32>
    %cst_15 = arith.constant 1.000000e+00 : f32
    %29 = vector.broadcast %cst_15 : f32 to vector<8x2048xf32>
    %30 = arith.subf %29, %9 : vector<8x2048xf32>
    %31 = math.log %30 : vector<8x2048xf32>
    %cst_16 = arith.constant -1.000000e+02 : f32
    %32 = vector.broadcast %cst_16 : f32 to vector<8x2048xf32>
    %33 = arith.maximumf %31, %32 : vector<8x2048xf32>
    %34 = arith.subf %28, %33 : vector<8x2048xf32>
    %35 = arith.mulf %11, %34 : vector<8x2048xf32>
    %36 = arith.addf %33, %35 : vector<8x2048xf32>
    %cst_17 = arith.constant dense<0.000000e+00> : vector<8xf32>
    %37 = vector.multi_reduction <add>, %36, %cst_17 [1] : vector<8x2048xf32> to vector<8xf32>
    %38 = vector.shape_cast %37 : vector<8xf32> to vector<8x1xf32>
    %cst_18 = arith.constant 0.000000e+00 : f32
    %39 = vector.broadcast %cst_18 : f32 to vector<8x1xf32>
    %40 = arith.subf %39, %38 : vector<8x1xf32>
    %c0_19 = arith.constant 0 : index
    %c0_20 = arith.constant 0 : index
    %c0_21 = arith.constant 0 : index
    %c0_22 = arith.constant 0 : index
    %41 = vector.load %arg6[%c0_19, %c0_20, %c0_21, %c0_22] : memref<1x1x8x1xf32, #tpu.memory_space<vmem>>, vector<1x1x8x1xf32>
    %42 = vector.shape_cast %41 : vector<1x1x8x1xf32> to vector<8x1xf32>
    %43 = vector.shape_cast %40 : vector<8x1xf32> to vector<1x1x8x1xf32>
    tpu.vector_store %arg6[%c0_19, %c0_20, %c0_21, %c0_22], %43 {strides = array<i32>} : memref<1x1x8x1xf32, #tpu.memory_space<vmem>>, vector<1x1x8x1xf32>,
    return
  }
  func.func @transform_0(%arg0: i32, %arg1: i32) -> (i32, i32) {
    %c0_i32 = arith.constant 0 : i32
    return %arg0, %arg1 : i32, i32
  }
  func.func @transform_1(%arg0: i32, %arg1: i32) -> (i32, i32) {
    %c0_i32 = arith.constant 0 : i32
    return %arg0, %arg1 : i32, i32
  }
  func.func @transform_2(%arg0: i32, %arg1: i32) -> (i32, i32, i32, i32) {
    %c0_i32 = arith.constant 0 : i32
    %c0_i32_0 = arith.constant 0 : i32
    %c0_i32_1 = arith.constant 0 : i32
    return %arg0, %arg1, %c0_i32, %c0_i32_0 : i32, i32, i32, i32
  }
  func.func @transform_3(%arg0: i32, %arg1: i32) -> (i32, i32, i32, i32) {
    %c0_i32 = arith.constant 0 : i32
    %c0_i32_0 = arith.constant 0 : i32
    %c0_i32_1 = arith.constant 0 : i32
    return %arg0, %arg1, %c0_i32, %c0_i32_0 : i32, i32, i32, i32
  }
  func.func @transform_4(%arg0: i32, %arg1: i32) -> (i32, i32, i32, i32) {
    %c0_i32 = arith.constant 0 : i32
    %c0_i32_0 = arith.constant 0 : i32
    %c0_i32_1 = arith.constant 0 : i32
    return %arg0, %arg1, %c0_i32, %c0_i32_0 : i32, i32, i32, i32
  }
}

</mosaic_0001>

<llo_original>
// kernel: tpu_custom_call.1
$region0: #{tpu_custom_call.1}
  #allocation0 [shape = 'u32[]', space=smem, size = 0x4, offset = 0x4, fixed_abs, tag = 'smem constant byte address 0x4 - core index']
  #allocation1 [shape = 'u32[144,128]{1,0:T(1,128)}', space=vmem, size = 0x12000, scoped, tag = 'internal scratch']
  %s0 = inlined_call_operand.hbm [shape: f32[10,2112], index: 0, kind: input, shape index: {}]
  %s1 = inlined_call_operand.hbm [shape: f32[10,2112], index: 1, kind: input, shape index: {}]
  %s2 = inlined_call_operand.vmem [shape: f32[2,2,8,1], index: 2, kind: output, shape index: {0}]
  %s3 = inlined_call_operand.vmem [shape: f32[2,2,8,1], index: 3, kind: output, shape index: {1}]
  %s4 = inlined_call_operand.vmem [shape: f32[2,2,8,1], index: 4, kind: output, shape index: {2}]
  %5 = xla_tuple %s2, %s3, %s4
  %s6 = sld [smem:[#allocation0]]
  $region65: #{tpu_custom_call.1} parent=0
    _
  %s8 = ssub.s32 1, %s6
  %s9 = scalar_select 0, %s8, %s6
  $region1: #{tpu_custom_call.1} parent=0
    #allocation2 [shape = 'u8[131072]{0}', space=vmem, size = 0x20000, scoped, tag = 'input window, operand 0']
    #allocation3 [shape = 's32[2]{0}', space=sflag, size = 0x8, scoped, tag = 'scoped memory for tpu_custom_call.1']
    #allocation4 [shape = 'u8[131072]{0}', space=vmem, size = 0x20000, scoped, tag = 'input window, operand 1']
    #allocation5 [shape = 's32[2]{0}', space=sflag, size = 0x8, scoped, tag = 'scoped memory for tpu_custom_call.1']
    %10 = vsyncpa [#allocation3], 0
    %s11 = scalar_lea.sflag [#allocation3], 1
    %12 = vsyncpa %s11, 0
    %13 = vsyncpa [#allocation5], 0
    %s14 = scalar_lea.sflag [#allocation5], 1
    %15 = vsyncpa %s14, 0
    loop: start=0, step=1, limit=6
    $region2: #{tpu_custom_call.1} parent=1 // loop_pre_header
      _
    $region3: #{tpu_custom_call.1} parent=1 // loop_header
      %s17 = sphi 0, %s21
      %p18 = scmp.ge.s32.totalorder %s17, 6
      %s24 = sphi 0, %s36
      %s25 = sphi 0, %s32
      %s26 = sphi 0, %s24
      %s27 = sphi 0, %s25
      %s28 = sphi 0, %s26
      %s29 = sphi 0, %s27
      %s41 = sphi 0, %s43
      %s44 = sphi 0, %s41
      %s45 = sphi 0, %s44
      %s61 = sphi 0, %s45
      %s69 = sphi 0, %s71
      %s72 = sphi 0, %s69
      %s73 = sphi 0, %s72
      %s89 = sphi 0, %s73
      %s97 = sphi 0, %s99
      %s100 = sphi 0, %s97
      %s101 = sphi 0, %s100
      %s117 = sphi 0, %s101
      %s125 = sphi 0, %s127
      %s128 = sphi 0, %s125
      %s129 = sphi 0, %s128
      %s145 = sphi 0, %s129
      %s153 = sphi 0, %s155
      %s156 = sphi 0, %s153
      %s157 = sphi 0, %s156
      %s173 = sphi 0, %s157
    $region4: #{tpu_custom_call.1} parent=1 // loop_header_branch
      %20 = sbr.rel (%p18) target = $region8
    $region5: #{tpu_custom_call.1} parent=1 // loop_body
      %s22 = ssub.s32 %s17, 1
      %s23 = ssub.s32 %s17, 2
      %s30 = sadd.s32 1, %s25
      %p31 = scmp.ge.s32.totalorder %s30, 2
      %s32 = scalar_select %p31, 0, %s30
      %s33 = sadd.s32 1, %s24
      %s34 = scalar_select %p31, %s33, %s24
      %p35 = scmp.ge.s32.totalorder %s34, 2
      %s36 = scalar_select %p35, 0, %s34
      %s37 = ssub.s32 %s24, %s36
      %s38 = ssub.s32 %s25, %s32
      %s39 = sor.u32 %s37, %s38
      %p40 = scmp.eq.s32.totalorder %s39, 0
      %s42 = sadd.s32 %s41, 1
      %s43 = scalar_select %p40, %s41, %s42
      %p46 = pneg %p40
      %p47 = scmp.eq.s32.totalorder %s17, 3
      %p48 = por %p46, %p47
      %p49 = scmp.ne.s32.totalorder %s41, %s44
      %p50 = scmp.eq.s32.totalorder %s17, 0
      %p51 = por %p49, %p50
      %p52 = scmp.ne.s32.totalorder %s41, %s44
      %p53 = scmp.eq.s32.totalorder %s22, 3
      %p54 = por %p52, %p53
      %p55 = scmp.ne.s32.totalorder %s44, %s45
      %p56 = scmp.eq.s32.totalorder %s22, 0
      %p57 = por %p55, %p56
      %p58 = scmp.ne.s32.totalorder %s44, %s45
      %p59 = scmp.eq.s32.totalorder %s23, 3
      %p60 = por %p58, %p59
      %p62 = scmp.ne.s32.totalorder %s45, %s61
      %p63 = scmp.eq.s32.totalorder %s23, 0
      %p64 = por %p62, %p63
      %s65 = ssub.s32 %s24, %s36
      %s66 = ssub.s32 %s25, %s32
      %s67 = sor.u32 %s65, %s66
      %p68 = scmp.eq.s32.totalorder %s67, 0
      %s70 = sadd.s32 %s69, 1
      %s71 = scalar_select %p68, %s69, %s70
      %p74 = pneg %p68
      %p75 = scmp.eq.s32.totalorder %s17, 3
      %p76 = por %p74, %p75
      %p77 = scmp.ne.s32.totalorder %s69, %s72
      %p78 = scmp.eq.s32.totalorder %s17, 0
      %p79 = por %p77, %p78
      %p80 = scmp.ne.s32.totalorder %s69, %s72
      %p81 = scmp.eq.s32.totalorder %s22, 3
      %p82 = por %p80, %p81
      %p83 = scmp.ne.s32.totalorder %s72, %s73
      %p84 = scmp.eq.s32.totalorder %s22, 0
      %p85 = por %p83, %p84
      %p86 = scmp.ne.s32.totalorder %s72, %s73
      %p87 = scmp.eq.s32.totalorder %s23, 3
      %p88 = por %p86, %p87
      %p90 = scmp.ne.s32.totalorder %s73, %s89
      %p91 = scmp.eq.s32.totalorder %s23, 0
      %p92 = por %p90, %p91
      %s93 = ssub.s32 %s24, %s36
      %s94 = ssub.s32 %s25, %s32
      %s95 = sor.u32 %s93, %s94
      %p96 = scmp.eq.s32.totalorder %s95, 0
      %s98 = sadd.s32 %s97, 1
      %s99 = scalar_select %p96, %s97, %s98
      %p102 = pneg %p96
      %p103 = scmp.eq.s32.totalorder %s17, 3
      %p104 = por %p102, %p103
      %p105 = scmp.ne.s32.totalorder %s97, %s100
      %p106 = scmp.eq.s32.totalorder %s17, 0
      %p107 = por %p105, %p106
      %p108 = scmp.ne.s32.totalorder %s97, %s100
      %p109 = scmp.eq.s32.totalorder %s22, 3
      %p110 = por %p108, %p109
      %p111 = scmp.ne.s32.totalorder %s100, %s101
      %p112 = scmp.eq.s32.totalorder %s22, 0
      %p113 = por %p111, %p112
      %p114 = scmp.ne.s32.totalorder %s100, %s101
      %p115 = scmp.eq.s32.totalorder %s23, 3
      %p116 = por %p114, %p115
      %p118 = scmp.ne.s32.totalorder %s101, %s117
      %p119 = scmp.eq.s32.totalorder %s23, 0
      %p120 = por %p118, %p119
      %s121 = ssub.s32 %s24, %s36
      %s122 = ssub.s32 %s25, %s32
      %s123 = sor.u32 %s121, %s122
      %p124 = scmp.eq.s32.totalorder %s123, 0
      %s126 = sadd.s32 %s125, 1
      %s127 = scalar_select %p124, %s125, %s126
      %p130 = pneg %p124
      %p131 = scmp.eq.s32.totalorder %s17, 3
      %p132 = por %p130, %p131
      %p133 = scmp.ne.s32.totalorder %s125, %s128
      %p134 = scmp.eq.s32.totalorder %s17, 0
      %p135 = por %p133, %p134
      %p136 = scmp.ne.s32.totalorder %s125, %s128
      %p137 = scmp.eq.s32.totalorder %s22, 3
      %p138 = por %p136, %p137
      %p139 = scmp.ne.s32.totalorder %s128, %s129
      %p140 = scmp.eq.s32.totalorder %s22, 0
      %p141 = por %p139, %p140
      %p142 = scmp.ne.s32.totalorder %s128, %s129
      %p143 = scmp.eq.s32.totalorder %s23, 3
      %p144 = por %p142, %p143
      %p146 = scmp.ne.s32.totalorder %s129, %s145
      %p147 = scmp.eq.s32.totalorder %s23, 0
      %p148 = por %p146, %p147
      %s149 = ssub.s32 %s24, %s36
      %s150 = ssub.s32 %s25, %s32
      %s151 = sor.u32 %s149, %s150
      %p152 = scmp.eq.s32.totalorder %s151, 0
      %s154 = sadd.s32 %s153, 1
      %s155 = scalar_select %p152, %s153, %s154
      %p158 = pneg %p152
      %p159 = scmp.eq.s32.totalorder %s17, 3
      %p160 = por %p158, %p159
      %p161 = scmp.ne.s32.totalorder %s153, %s156
      %p162 = scmp.eq.s32.totalorder %s17, 0
      %p163 = por %p161, %p162
      %p164 = scmp.ne.s32.totalorder %s153, %s156
      %p165 = scmp.eq.s32.totalorder %s22, 3
      %p166 = por %p164, %p165
      %p167 = scmp.ne.s32.totalorder %s156, %s157
      %p168 = scmp.eq.s32.totalorder %s22, 0
      %p169 = por %p167, %p168
      %p170 = scmp.ne.s32.totalorder %s156, %s157
      %p171 = scmp.eq.s32.totalorder %s23, 3
      %p172 = por %p170, %p171
      %p174 = scmp.ne.s32.totalorder %s157, %s173
      %p175 = scmp.eq.s32.totalorder %s23, 0
      %p176 = por %p174, %p175
      %p177 = scmp.le.s32.totalorder 1, %s17
      %p178 = scmp.lt.s32.totalorder %s17, 5
      %p179 = pnand %p177, %p178
      %p180 = pneg %p179
      // Predicated region
      $region9: #{tpu_custom_call.1} parent=5 // pred_check
        _
      $region10: #{tpu_custom_call.1} parent=5 // pred_check_branch
        %182 = sbr.rel (%p179) target = $region12
      $region11: #{tpu_custom_call.1} parent=5 // pred_region
        %s183 = ssub.s32 %s17, 1
      $region12: #{tpu_custom_call.1} parent=5 // pred_fallthru
        _
      %p184 = scmp.lt.s32.totalorder %s17, 4
      // Predicated region
      $region13: #{tpu_custom_call.1} parent=5 // pred_check
        %p185 = pneg %p184
      $region14: #{tpu_custom_call.1} parent=5 // pred_check_branch
        %187 = sbr.rel (%p185) target = $region16
      $region15: #{tpu_custom_call.1} parent=5 // pred_region
        // Predicated region
        $region17: #{tpu_custom_call.1} parent=15 // pred_check
          %p188 = pneg %p51
        $region18: #{tpu_custom_call.1} parent=15 // pred_check_branch
          %190 = sbr.rel (%p188) target = $region20
        $region19: #{tpu_custom_call.1} parent=15 // pred_region
          %s191 = sand.u32 %s41, 1
          %s192 = scalar_lea.sflag [#allocation3], %s191
          %s193 = sand.u32 %s41, 1
          %s194 = smul.addr %s193, 128
          %s195 = scalar_lea.vmem [#allocation2], %s194
          %s196 = smul.u32 16, %s25
          %s197 = ssub.s32 17, %s196
          %p198 = scmp.lt.s32.totalorder %s197, 16
          %s199 = scalar_select %p198, %s197, 16
          %s200 = smul.u32 128, %s199
          %s202 = ssub.s32 2048, %s200
          %203 = vsyncadd %s192, %s202
          %p204 = scmp.ne.s32.totalorder 0, %s200
          %s205 = smul.addr %s24, 17
          %s206 = sadd.s32 %s196, %s205
          %s207 = smul.addr %s206, 128
          %s208 = scalar_lea.hbm %s0, %s207
          %s209 = smul.u32 %s199, 8
          %s210 = sshll.u32 %s209, 4
          %s211 = sshll.u32 %s195, 4
          %s212 = int_to_ptr.vmem [resolvable:$true] %s211
          %214 = dma.hbm_to_vmem [thread:$0]  (%p204), %s208, %s210, %s212, %s192
        $region20: #{tpu_custom_call.1} parent=15 // pred_fallthru
          _
        // Predicated region
        $region21: #{tpu_custom_call.1} parent=15 // pred_check
          %p215 = pneg %p79
        $region22: #{tpu_custom_call.1} parent=15 // pred_check_branch
          %217 = sbr.rel (%p215) target = $region24
        $region23: #{tpu_custom_call.1} parent=15 // pred_region
          %s218 = sand.u32 %s69, 1
          %s219 = scalar_lea.sflag [#allocation5], %s218
          %s220 = sand.u32 %s69, 1
          %s221 = smul.addr %s220, 128
          %s222 = scalar_lea.vmem [#allocation4], %s221
          %s223 = smul.u32 16, %s25
          %s224 = ssub.s32 17, %s223
          %p225 = scmp.lt.s32.totalorder %s224, 16
          %s226 = scalar_select %p225, %s224, 16
          %s227 = smul.u32 128, %s226
          %s229 = ssub.s32 2048, %s227
          %230 = vsyncadd %s219, %s229
          %p231 = scmp.ne.s32.totalorder 0, %s227
          %s232 = smul.addr %s24, 17
          %s233 = sadd.s32 %s223, %s232
          %s234 = smul.addr %s233, 128
          %s235 = scalar_lea.hbm %s1, %s234
          %s236 = smul.u32 %s226, 8
          %s237 = sshll.u32 %s236, 4
          %s238 = sshll.u32 %s222, 4
          %s239 = int_to_ptr.vmem [resolvable:$true] %s238
          %241 = dma.hbm_to_vmem [thread:$0]  (%p231), %s235, %s237, %s239, %s219
        $region24: #{tpu_custom_call.1} parent=15 // pred_fallthru
          _
      $region16: #{tpu_custom_call.1} parent=5 // pred_fallthru
        _
      %p242 = scmp.le.s32.totalorder 1, %s17
      %p243 = scmp.lt.s32.totalorder %s17, 5
      %p244 = pnand %p242, %p243
      %p245 = pneg %p244
      // Predicated region
      $region25: #{tpu_custom_call.1} parent=5 // pred_check
        _
      $region26: #{tpu_custom_call.1} parent=5 // pred_check_branch
        %247 = sbr.rel (%p244) target = $region28
      $region27: #{tpu_custom_call.1} parent=5 // pred_region
        %s248 = ssub.s32 %s17, 1
        %s249 = sand.u32 %s44, 1
        %s250 = scalar_lea.sflag [#allocation3], %s249
        %s251 = sand.u32 %s44, 1
        %s252 = smul.addr %s251, 128
        %s253 = scalar_lea.vmem [#allocation2], %s252
        // Predicated region
        $region29: #{tpu_custom_call.1} parent=27 // pred_check
          %p254 = pneg %p57
        $region30: #{tpu_custom_call.1} parent=27 // pred_check_branch
          %256 = sbr.rel (%p254) target = $region32
        $region31: #{tpu_custom_call.1} parent=27 // pred_region
          %257 = dma.done %s250, 2048
        $region32: #{tpu_custom_call.1} parent=27 // pred_fallthru
          _
        %s258 = sand.u32 %s72, 1
        %s259 = scalar_lea.sflag [#allocation5], %s258
        %s260 = sand.u32 %s72, 1
        %s261 = smul.addr %s260, 128
        %s262 = scalar_lea.vmem [#allocation4], %s261
        // Predicated region
        $region33: #{tpu_custom_call.1} parent=27 // pred_check
          %p263 = pneg %p85
        $region34: #{tpu_custom_call.1} parent=27 // pred_check_branch
          %265 = sbr.rel (%p263) target = $region36
        $region35: #{tpu_custom_call.1} parent=27 // pred_region
          %266 = dma.done %s259, 2048
        $region36: #{tpu_custom_call.1} parent=27 // pred_fallthru
          _
        %s267 = sand.u32 %s44, 1
        %s268 = scalar_lea.sflag [#allocation3], %s267
        %s269 = sand.u32 %s44, 1
        %s270 = smul.addr %s269, 128
        %s271 = scalar_lea.vmem [#allocation2], %s270
        %p272 = pneg %p57
        %p273 = pneg %p54
        %s274 = sand.u32 %s72, 1
        %s275 = scalar_lea.sflag [#allocation5], %s274
        %s276 = sand.u32 %s72, 1
        %s277 = smul.addr %s276, 128
        %s278 = scalar_lea.vmem [#allocation4], %s277
        %p279 = pneg %p85
        %p280 = pneg %p82
        %p281 = pneg %p113
        %p282 = pneg %p110
        %p283 = scmp.lt.s32.totalorder %s26, 1
        %s284 = scalar_select %p283, %s26, 1
        %p285 = scmp.lt.s32.totalorder %s27, 1
        %s286 = scalar_select %p285, %s27, 1
        %s287 = smul.addr %s284, 2
        %s288 = sadd.s32 %s286, %s287
        %s289 = smul.addr %s288, 8
        %s290 = scalar_lea.vmem %s2, %s289
        %p291 = pneg %p141
        %p292 = pneg %p138
        %p293 = scmp.lt.s32.totalorder %s26, 1
        %s294 = scalar_select %p293, %s26, 1
        %p295 = scmp.lt.s32.totalorder %s27, 1
        %s296 = scalar_select %p295, %s27, 1
        %s297 = smul.addr %s294, 2
        %s298 = sadd.s32 %s296, %s297
        %s299 = smul.addr %s298, 8
        %s300 = scalar_lea.vmem %s3, %s299
        %p301 = pneg %p169
        %p302 = pneg %p166
        %p303 = scmp.lt.s32.totalorder %s26, 1
        %s304 = scalar_select %p303, %s26, 1
        %p305 = scmp.lt.s32.totalorder %s27, 1
        %s306 = scalar_select %p305, %s27, 1
        %s307 = smul.addr %s304, 2
        %s308 = sadd.s32 %s306, %s307
        %s309 = smul.addr %s308, 8
        %s310 = scalar_lea.vmem %s4, %s309
        %s311 = smul.u32 16, %s27
        %s312 = ssub.s32 17, %s311
        %p313 = scmp.lt.s32.totalorder %s312, 16
        %s314 = scalar_select %p313, %s312, 16
        %s315 = smul.u32 128, %s314
        %s316 = smul.u32 16, %s27
        %s317 = ssub.s32 17, %s316
        %p318 = scmp.lt.s32.totalorder %s317, 16
        %s319 = scalar_select %p318, %s317, 16
        %s320 = smul.u32 128, %s319
        %p321 = scmp.lt.s32.totalorder %s26, 1
        %s322 = scalar_select %p321, %s26, 1
        %p323 = scmp.lt.s32.totalorder %s27, 1
        %s324 = scalar_select %p323, %s27, 1
        %s325 = smul.addr %s322, 2
        %s326 = sadd.s32 %s324, %s325
        %s327 = smul.addr %s326, 8
        %s328 = scalar_lea.vmem %s2, %s327
        %p329 = scmp.lt.s32.totalorder %s26, 1
        %s330 = scalar_select %p329, %s26, 1
        %p331 = scmp.lt.s32.totalorder %s27, 1
        %s332 = scalar_select %p331, %s27, 1
        %s333 = smul.addr %s330, 2
        %s334 = sadd.s32 %s332, %s333
        %s335 = smul.addr %s334, 8
        %s336 = scalar_lea.vmem %s3, %s335
        %p337 = scmp.lt.s32.totalorder %s26, 1
        %s338 = scalar_select %p337, %s26, 1
        %p339 = scmp.lt.s32.totalorder %s27, 1
        %s340 = scalar_select %p339, %s27, 1
        %s341 = smul.addr %s338, 2
        %s342 = sadd.s32 %s340, %s341
        %s343 = smul.addr %s342, 8
        %s344 = scalar_lea.vmem %s4, %s343
        %v345 = vld [vmem:[%s253] sm:$0xff]
        %v346 = vld [vmem:[%s253 + $0x8] sm:$0xff]
        %v347 = vld [vmem:[%s253 + $0x10] sm:$0xff]
        %v348 = vld [vmem:[%s253 + $0x18] sm:$0xff]
        %v349 = vld [vmem:[%s253 + $0x20] sm:$0xff]
        %v350 = vld [vmem:[%s253 + $0x28] sm:$0xff]
        %v351 = vld [vmem:[%s253 + $0x30] sm:$0xff]
        %v352 = vld [vmem:[%s253 + $0x38] sm:$0xff]
        %v353 = vld [vmem:[%s253 + $0x40] sm:$0xff]
        %v354 = vld [vmem:[%s253 + $0x48] sm:$0xff]
        %v355 = vld [vmem:[%s253 + $0x50] sm:$0xff]
        %v356 = vld [vmem:[%s253 + $0x58] sm:$0xff]
        %v357 = vld [vmem:[%s253 + $0x60] sm:$0xff]
        %v358 = vld [vmem:[%s253 + $0x68] sm:$0xff]
        %v359 = vld [vmem:[%s253 + $0x70] sm:$0xff]
        %v360 = vld [vmem:[%s253 + $0x78] sm:$0xff]
        %v361 = vld [vmem:[%s262] sm:$0xff]
        %v362 = vld [vmem:[%s262 + $0x8] sm:$0xff]
        %v363 = vld [vmem:[%s262 + $0x10] sm:$0xff]
        %v364 = vld [vmem:[%s262 + $0x18] sm:$0xff]
        %v365 = vld [vmem:[%s262 + $0x20] sm:$0xff]
        %v366 = vld [vmem:[%s262 + $0x28] sm:$0xff]
        %v367 = vld [vmem:[%s262 + $0x30] sm:$0xff]
        %v368 = vld [vmem:[%s262 + $0x38] sm:$0xff]
        %v369 = vld [vmem:[%s262 + $0x40] sm:$0xff]
        %v370 = vld [vmem:[%s262 + $0x48] sm:$0xff]
        %v371 = vld [vmem:[%s262 + $0x50] sm:$0xff]
        %v372 = vld [vmem:[%s262 + $0x58] sm:$0xff]
        %v373 = vld [vmem:[%s262 + $0x60] sm:$0xff]
        %v374 = vld [vmem:[%s262 + $0x68] sm:$0xff]
        %v375 = vld [vmem:[%s262 + $0x70] sm:$0xff]
        %v376 = vld [vmem:[%s262 + $0x78] sm:$0xff]
        %v377 = vlaneseq
        %v378 = vand.u32 %v377, 127
        %v379 = vadd.s32 %v378, 128
        %v380 = vadd.s32 %v378, 256
        %v381 = vadd.s32 %v378, 384
        %v382 = vadd.s32 %v378, 512
        %v383 = vadd.s32 %v378, 640
        %v384 = vadd.s32 %v378, 768
        %v385 = vadd.s32 %v378, 896
        %v386 = vadd.s32 %v378, 1024
        %v387 = vadd.s32 %v378, 1152
        %v388 = vadd.s32 %v378, 1280
        %v389 = vadd.s32 %v378, 1408
        %v390 = vadd.s32 %v378, 1536
        %v391 = vadd.s32 %v378, 1664
        %v392 = vadd.s32 %v378, 1792
        %v393 = vadd.s32 %v378, 1920
        %s394 = smul.u32 %s27, 2048
        %v395 = vstv %s394
        %v396 = vadd.s32 %v378, %v395
        %v397 = vadd.s32 %v379, %v395
        %v398 = vadd.s32 %v380, %v395
        %v399 = vadd.s32 %v381, %v395
        %v400 = vadd.s32 %v382, %v395
        %v401 = vadd.s32 %v383, %v395
        %v402 = vadd.s32 %v384, %v395
        %v403 = vadd.s32 %v385, %v395
        %v404 = vadd.s32 %v386, %v395
        %v405 = vadd.s32 %v387, %v395
        %v406 = vadd.s32 %v388, %v395
        %v407 = vadd.s32 %v389, %v395
        %v408 = vadd.s32 %v390, %v395
        %v409 = vadd.s32 %v391, %v395
        %v410 = vadd.s32 %v392, %v395
        %v411 = vadd.s32 %v393, %v395
        %vm412 = vcmp.lt.s32.totalorder %v396, 2112
        %vm413 = vcmp.lt.s32.totalorder %v397, 2112
        %vm414 = vcmp.lt.s32.totalorder %v398, 2112
        %vm415 = vcmp.lt.s32.totalorder %v399, 2112
        %vm416 = vcmp.lt.s32.totalorder %v400, 2112
        %vm417 = vcmp.lt.s32.totalorder %v401, 2112
        %vm418 = vcmp.lt.s32.totalorder %v402, 2112
        %vm419 = vcmp.lt.s32.totalorder %v403, 2112
        %vm420 = vcmp.lt.s32.totalorder %v404, 2112
        %vm421 = vcmp.lt.s32.totalorder %v405, 2112
        %vm422 = vcmp.lt.s32.totalorder %v406, 2112
        %vm423 = vcmp.lt.s32.totalorder %v407, 2112
        %vm424 = vcmp.lt.s32.totalorder %v408, 2112
        %vm425 = vcmp.lt.s32.totalorder %v409, 2112
        %vm426 = vcmp.lt.s32.totalorder %v410, 2112
        %vm427 = vcmp.lt.s32.totalorder %v411, 2112
        %v428 = vsel %vm412, %v345, 0.0
        %v429 = vsel %vm413, %v346, 0.0
        %v430 = vsel %vm414, %v347, 0.0
        %v431 = vsel %vm415, %v348, 0.0
        %v432 = vsel %vm416, %v349, 0.0
        %v433 = vsel %vm417, %v350, 0.0
        %v434 = vsel %vm418, %v351, 0.0
        %v435 = vsel %vm419, %v352, 0.0
        %v436 = vsel %vm420, %v353, 0.0
        %v437 = vsel %vm421, %v354, 0.0
        %v438 = vsel %vm422, %v355, 0.0
        %v439 = vsel %vm423, %v356, 0.0
        %v440 = vsel %vm424, %v357, 0.0
        %v441 = vsel %vm425, %v358, 0.0
        %v442 = vsel %vm426, %v359, 0.0
        %v443 = vsel %vm427, %v360, 0.0
        %v444 = vsel %vm412, %v361, 0.0
        %v445 = vsel %vm413, %v362, 0.0
        %v446 = vsel %vm414, %v363, 0.0
        %v447 = vsel %vm415, %v364, 0.0
        %v448 = vsel %vm416, %v365, 0.0
        %v449 = vsel %vm417, %v366, 0.0
        %v450 = vsel %vm418, %v367, 0.0
        %v451 = vsel %vm419, %v368, 0.0
        %v452 = vsel %vm420, %v369, 0.0
        %v453 = vsel %vm421, %v370, 0.0
        %v454 = vsel %vm422, %v371, 0.0
        %v455 = vsel %vm423, %v372, 0.0
        %v456 = vsel %vm424, %v373, 0.0
        %v457 = vsel %vm425, %v374, 0.0
        %v458 = vsel %vm426, %v375, 0.0
        %v459 = vsel %vm427, %v376, 0.0
        %v460 = vmul.f32 %v428, %v444
        %v461 = vmul.f32 %v429, %v445
        %v462 = vmul.f32 %v430, %v446
        %v463 = vmul.f32 %v431, %v447
        %v464 = vmul.f32 %v432, %v448
        %v465 = vmul.f32 %v433, %v449
        %v466 = vmul.f32 %v434, %v450
        %v467 = vmul.f32 %v435, %v451
        %v468 = vmul.f32 %v436, %v452
        %v469 = vmul.f32 %v437, %v453
        %v470 = vmul.f32 %v438, %v454
        %v471 = vmul.f32 %v439, %v455
        %v472 = vmul.f32 %v440, %v456
        %v473 = vmul.f32 %v441, %v457
        %v474 = vmul.f32 %v442, %v458
        %v475 = vmul.f32 %v443, %v459
        %v476 = vadd.f32 %v460, %v461
        %v477 = vadd.f32 %v476, %v462
        %v478 = vadd.f32 %v477, %v463
        %v479 = vadd.f32 %v478, %v464
        %v480 = vadd.f32 %v479, %v465
        %v481 = vadd.f32 %v480, %v466
        %v482 = vadd.f32 %v481, %v467
        %v483 = vadd.f32 %v482, %v468
        %v484 = vadd.f32 %v483, %v469
        %v485 = vadd.f32 %v484, %v470
        %v486 = vadd.f32 %v485, %v471
        %v487 = vadd.f32 %v486, %v472
        %v488 = vadd.f32 %v487, %v473
        %v489 = vadd.f32 %v488, %v474
        %v490 = vadd.f32 %v489, %v475
        %491 = vadd.xlane.f32.xlu0 %v490
        %v492 = vpop.xlane.xlu0 %491
        %vm493 = vcmask 7168
        %494 = vst.msk [vmem:[%s328] sm:$0xff] %vm493, %v492
        %v495 = vmul.f32 %v428, %v428
        %v496 = vmul.f32 %v429, %v429
        %v497 = vmul.f32 %v430, %v430
        %v498 = vmul.f32 %v431, %v431
        %v499 = vmul.f32 %v432, %v432
        %v500 = vmul.f32 %v433, %v433
        %v501 = vmul.f32 %v434, %v434
        %v502 = vmul.f32 %v435, %v435
        %v503 = vmul.f32 %v436, %v436
        %v504 = vmul.f32 %v437, %v437
        %v505 = vmul.f32 %v438, %v438
        %v506 = vmul.f32 %v439, %v439
        %v507 = vmul.f32 %v440, %v440
        %v508 = vmul.f32 %v441, %v441
        %v509 = vmul.f32 %v442, %v442
        %v510 = vmul.f32 %v443, %v443
        %v511 = vmul.f32 %v444, %v444
        %v512 = vmul.f32 %v445, %v445
        %v513 = vmul.f32 %v446, %v446
        %v514 = vmul.f32 %v447, %v447
        %v515 = vmul.f32 %v448, %v448
        %v516 = vmul.f32 %v449, %v449
        %v517 = vmul.f32 %v450, %v450
        %v518 = vmul.f32 %v451, %v451
        %v519 = vmul.f32 %v452, %v452
        %v520 = vmul.f32 %v453, %v453
        %v521 = vmul.f32 %v454, %v454
        %v522 = vmul.f32 %v455, %v455
        %v523 = vmul.f32 %v456, %v456
        %v524 = vmul.f32 %v457, %v457
        %v525 = vmul.f32 %v458, %v458
        %v526 = vmul.f32 %v459, %v459
        %v527 = vadd.f32 %v495, %v511
        %v528 = vadd.f32 %v496, %v512
        %v529 = vadd.f32 %v497, %v513
        %v530 = vadd.f32 %v498, %v514
        %v531 = vadd.f32 %v499, %v515
        %v532 = vadd.f32 %v500, %v516
        %v533 = vadd.f32 %v501, %v517
        %v534 = vadd.f32 %v502, %v518
        %v535 = vadd.f32 %v503, %v519
        %v536 = vadd.f32 %v504, %v520
        %v537 = vadd.f32 %v505, %v521
        %v538 = vadd.f32 %v506, %v522
        %v539 = vadd.f32 %v507, %v523
        %v540 = vadd.f32 %v508, %v524
        %v541 = vadd.f32 %v509, %v525
        %v542 = vadd.f32 %v510, %v526
        %v543 = vadd.f32 %v527, %v528
        %v544 = vadd.f32 %v543, %v529
        %v545 = vadd.f32 %v544, %v530
        %v546 = vadd.f32 %v545, %v531
        %v547 = vadd.f32 %v546, %v532
        %v548 = vadd.f32 %v547, %v533
        %v549 = vadd.f32 %v548, %v534
        %v550 = vadd.f32 %v549, %v535
        %v551 = vadd.f32 %v550, %v536
        %v552 = vadd.f32 %v551, %v537
        %v553 = vadd.f32 %v552, %v538
        %v554 = vadd.f32 %v553, %v539
        %v555 = vadd.f32 %v554, %v540
        %v556 = vadd.f32 %v555, %v541
        %v557 = vadd.f32 %v556, %v542
        %558 = vadd.xlane.f32.xlu0 %v557
        %v559 = vpop.xlane.xlu0 %558
        %560 = vst.msk [vmem:[%s336] sm:$0xff] %vm493, %v559
        %v561 = vlog2.pop %v428
        %v562 = vmul.f32 %v561, 0.6931472
        %v563 = vlog2.pop %v429
        %v564 = vmul.f32 %v563, 0.6931472
        %v565 = vlog2.pop %v430
        %v566 = vmul.f32 %v565, 0.6931472
        %v567 = vlog2.pop %v431
        %v568 = vmul.f32 %v567, 0.6931472
        %v569 = vlog2.pop %v432
        %v570 = vmul.f32 %v569, 0.6931472
        %v571 = vlog2.pop %v433
        %v572 = vmul.f32 %v571, 0.6931472
        %v573 = vlog2.pop %v434
        %v574 = vmul.f32 %v573, 0.6931472
        %v575 = vlog2.pop %v435
        %v576 = vmul.f32 %v575, 0.6931472
        %v577 = vlog2.pop %v436
        %v578 = vmul.f32 %v577, 0.6931472
        %v579 = vlog2.pop %v437
        %v580 = vmul.f32 %v579, 0.6931472
        %v581 = vlog2.pop %v438
        %v582 = vmul.f32 %v581, 0.6931472
        %v583 = vlog2.pop %v439
        %v584 = vmul.f32 %v583, 0.6931472
        %v585 = vlog2.pop %v440
        %v586 = vmul.f32 %v585, 0.6931472
        %v587 = vlog2.pop %v441
        %v588 = vmul.f32 %v587, 0.6931472
        %v589 = vlog2.pop %v442
        %v590 = vmul.f32 %v589, 0.6931472
        %v591 = vlog2.pop %v443
        %v592 = vmul.f32 %v591, 0.6931472
        %v593 = vmax.f32 %v562, -100.0
        %v594 = vmax.f32 %v564, -100.0
        %v595 = vmax.f32 %v566, -100.0
        %v596 = vmax.f32 %v568, -100.0
        %v597 = vmax.f32 %v570, -100.0
        %v598 = vmax.f32 %v572, -100.0
        %v599 = vmax.f32 %v574, -100.0
        %v600 = vmax.f32 %v576, -100.0
        %v601 = vmax.f32 %v578, -100.0
        %v602 = vmax.f32 %v580, -100.0
        %v603 = vmax.f32 %v582, -100.0
        %v604 = vmax.f32 %v584, -100.0
        %v605 = vmax.f32 %v586, -100.0
        %v606 = vmax.f32 %v588, -100.0
        %v607 = vmax.f32 %v590, -100.0
        %v608 = vmax.f32 %v592, -100.0
        %v609 = vsub.f32 1.0, %v428
        %v610 = vsub.f32 1.0, %v429
        %v611 = vsub.f32 1.0, %v430
        %v612 = vsub.f32 1.0, %v431
        %v613 = vsub.f32 1.0, %v432
        %v614 = vsub.f32 1.0, %v433
        %v615 = vsub.f32 1.0, %v434
        %v616 = vsub.f32 1.0, %v435
        %v617 = vsub.f32 1.0, %v436
        %v618 = vsub.f32 1.0, %v437
        %v619 = vsub.f32 1.0, %v438
        %v620 = vsub.f32 1.0, %v439
        %v621 = vsub.f32 1.0, %v440
        %v622 = vsub.f32 1.0, %v441
        %v623 = vsub.f32 1.0, %v442
        %v624 = vsub.f32 1.0, %v443
        %v625 = vlog2.pop %v609
        %v626 = vmul.f32 %v625, 0.6931472
        %v627 = vlog2.pop %v610
        %v628 = vmul.f32 %v627, 0.6931472
        %v629 = vlog2.pop %v611
        %v630 = vmul.f32 %v629, 0.6931472
        %v631 = vlog2.pop %v612
        %v632 = vmul.f32 %v631, 0.6931472
        %v633 = vlog2.pop %v613
        %v634 = vmul.f32 %v633, 0.6931472
        %v635 = vlog2.pop %v614
        %v636 = vmul.f32 %v635, 0.6931472
        %v637 = vlog2.pop %v615
        %v638 = vmul.f32 %v637, 0.6931472
        %v639 = vlog2.pop %v616
        %v640 = vmul.f32 %v639, 0.6931472
        %v641 = vlog2.pop %v617
        %v642 = vmul.f32 %v641, 0.6931472
        %v643 = vlog2.pop %v618
        %v644 = vmul.f32 %v643, 0.6931472
        %v645 = vlog2.pop %v619
        %v646 = vmul.f32 %v645, 0.6931472
        %v647 = vlog2.pop %v620
        %v648 = vmul.f32 %v647, 0.6931472
        %v649 = vlog2.pop %v621
        %v650 = vmul.f32 %v649, 0.6931472
        %v651 = vlog2.pop %v622
        %v652 = vmul.f32 %v651, 0.6931472
        %v653 = vlog2.pop %v623
        %v654 = vmul.f32 %v653, 0.6931472
        %v655 = vlog2.pop %v624
        %v656 = vmul.f32 %v655, 0.6931472
        %v657 = vmax.f32 %v626, -100.0
        %v658 = vmax.f32 %v628, -100.0
        %v659 = vmax.f32 %v630, -100.0
        %v660 = vmax.f32 %v632, -100.0
        %v661 = vmax.f32 %v634, -100.0
        %v662 = vmax.f32 %v636, -100.0
        %v663 = vmax.f32 %v638, -100.0
        %v664 = vmax.f32 %v640, -100.0
        %v665 = vmax.f32 %v642, -100.0
        %v666 = vmax.f32 %v644, -100.0
        %v667 = vmax.f32 %v646, -100.0
        %v668 = vmax.f32 %v648, -100.0
        %v669 = vmax.f32 %v650, -100.0
        %v670 = vmax.f32 %v652, -100.0
        %v671 = vmax.f32 %v654, -100.0
        %v672 = vmax.f32 %v656, -100.0
        %v673 = vsub.f32 %v593, %v657
        %v674 = vsub.f32 %v594, %v658
        %v675 = vsub.f32 %v595, %v659
        %v676 = vsub.f32 %v596, %v660
        %v677 = vsub.f32 %v597, %v661
        %v678 = vsub.f32 %v598, %v662
        %v679 = vsub.f32 %v599, %v663
        %v680 = vsub.f32 %v600, %v664
        %v681 = vsub.f32 %v601, %v665
        %v682 = vsub.f32 %v602, %v666
        %v683 = vsub.f32 %v603, %v667
        %v684 = vsub.f32 %v604, %v668
        %v685 = vsub.f32 %v605, %v669
        %v686 = vsub.f32 %v606, %v670
        %v687 = vsub.f32 %v607, %v671
        %v688 = vsub.f32 %v608, %v672
        %v689 = vmul.f32 %v444, %v673
        %v690 = vmul.f32 %v445, %v674
        %v691 = vmul.f32 %v446, %v675
        %v692 = vmul.f32 %v447, %v676
        %v693 = vmul.f32 %v448, %v677
        %v694 = vmul.f32 %v449, %v678
        %v695 = vmul.f32 %v450, %v679
        %v696 = vmul.f32 %v451, %v680
        %v697 = vmul.f32 %v452, %v681
        %v698 = vmul.f32 %v453, %v682
        %v699 = vmul.f32 %v454, %v683
        %v700 = vmul.f32 %v455, %v684
        %v701 = vmul.f32 %v456, %v685
        %v702 = vmul.f32 %v457, %v686
        %v703 = vmul.f32 %v458, %v687
        %v704 = vmul.f32 %v459, %v688
        %v705 = vadd.f32 %v657, %v689
        %v706 = vadd.f32 %v658, %v690
        %v707 = vadd.f32 %v659, %v691
        %v708 = vadd.f32 %v660, %v692
        %v709 = vadd.f32 %v661, %v693
        %v710 = vadd.f32 %v662, %v694
        %v711 = vadd.f32 %v663, %v695
        %v712 = vadd.f32 %v664, %v696
        %v713 = vadd.f32 %v665, %v697
        %v714 = vadd.f32 %v666, %v698
        %v715 = vadd.f32 %v667, %v699
        %v716 = vadd.f32 %v668, %v700
        %v717 = vadd.f32 %v669, %v701
        %v718 = vadd.f32 %v670, %v702
        %v719 = vadd.f32 %v671, %v703
        %v720 = vadd.f32 %v672, %v704
        %v721 = vadd.f32 %v705, %v706
        %v722 = vadd.f32 %v721, %v707
        %v723 = vadd.f32 %v722, %v708
        %v724 = vadd.f32 %v723, %v709
        %v725 = vadd.f32 %v724, %v710
        %v726 = vadd.f32 %v725, %v711
        %v727 = vadd.f32 %v726, %v712
        %v728 = vadd.f32 %v727, %v713
        %v729 = vadd.f32 %v728, %v714
        %v730 = vadd.f32 %v729, %v715
        %v731 = vadd.f32 %v730, %v716
        %v732 = vadd.f32 %v731, %v717
        %v733 = vadd.f32 %v732, %v718
        %v734 = vadd.f32 %v733, %v719
        %v735 = vadd.f32 %v734, %v720
        %736 = vadd.xlane.f32.xlu0 %v735
        %v737 = vpop.xlane.xlu0 %736
        %v738 = vsub.f32 0.0, %v737
        %739 = vst.msk [vmem:[%s344] sm:$0xff] %vm493, %v738
        %p740 = scmp.lt.s32.totalorder %s26, 1
        %s741 = scalar_select %p740, %s26, 1
        %p742 = scmp.lt.s32.totalorder %s27, 1
        %s743 = scalar_select %p742, %s27, 1
        %s744 = smul.addr %s741, 2
        %s745 = sadd.s32 %s743, %s744
        %s746 = smul.addr %s745, 8
        %s747 = scalar_lea.vmem %s2, %s746
        %p748 = scmp.lt.s32.totalorder %s26, 1
        %s749 = scalar_select %p748, %s26, 1
        %p750 = scmp.lt.s32.totalorder %s27, 1
        %s751 = scalar_select %p750, %s27, 1
        %s752 = smul.addr %s749, 2
        %s753 = sadd.s32 %s751, %s752
        %s754 = smul.addr %s753, 8
        %s755 = scalar_lea.vmem %s3, %s754
        %p756 = scmp.lt.s32.totalorder %s26, 1
        %s757 = scalar_select %p756, %s26, 1
        %p758 = scmp.lt.s32.totalorder %s27, 1
        %s759 = scalar_select %p758, %s27, 1
        %s760 = smul.addr %s757, 2
        %s761 = sadd.s32 %s759, %s760
        %s762 = smul.addr %s761, 8
        %s763 = scalar_lea.vmem %s4, %s762
        // Predicated region
        $region37: #{tpu_custom_call.1} parent=27 // pred_check
          %p764 = pneg %p110
        $region38: #{tpu_custom_call.1} parent=27 // pred_check_branch
          %766 = sbr.rel (%p764) target = $region40
        $region39: #{tpu_custom_call.1} parent=27 // pred_region
          _
        $region40: #{tpu_custom_call.1} parent=27 // pred_fallthru
          _
        // Predicated region
        $region41: #{tpu_custom_call.1} parent=27 // pred_check
          %p767 = pneg %p138
        $region42: #{tpu_custom_call.1} parent=27 // pred_check_branch
          %769 = sbr.rel (%p767) target = $region44
        $region43: #{tpu_custom_call.1} parent=27 // pred_region
          _
        $region44: #{tpu_custom_call.1} parent=27 // pred_fallthru
          _
        // Predicated region
        $region45: #{tpu_custom_call.1} parent=27 // pred_check
          %p770 = pneg %p166
        $region46: #{tpu_custom_call.1} parent=27 // pred_check_branch
          %772 = sbr.rel (%p770) target = $region48
        $region47: #{tpu_custom_call.1} parent=27 // pred_region
          _
        $region48: #{tpu_custom_call.1} parent=27 // pred_fallthru
          _
      $region28: #{tpu_custom_call.1} parent=5 // pred_fallthru
        _
      %p773 = scmp.le.s32.totalorder 2, %s17
      // Predicated region
      $region49: #{tpu_custom_call.1} parent=5 // pred_check
        %p774 = pneg %p773
      $region50: #{tpu_custom_call.1} parent=5 // pred_check_branch
        %776 = sbr.rel (%p774) target = $region52
      $region51: #{tpu_custom_call.1} parent=5 // pred_region
        %s777 = ssub.s32 %s17, 2
        // Predicated region
        $region53: #{tpu_custom_call.1} parent=51 // pred_check
          %p778 = pneg %p116
        $region54: #{tpu_custom_call.1} parent=51 // pred_check_branch
          %780 = sbr.rel (%p778) target = $region56
        $region55: #{tpu_custom_call.1} parent=51 // pred_region
          %p781 = scmp.lt.s32.totalorder %s28, 1
          %s782 = scalar_select %p781, %s28, 1
          %p783 = scmp.lt.s32.totalorder %s29, 1
          %s784 = scalar_select %p783, %s29, 1
          %s785 = smul.addr %s782, 2
          %s786 = sadd.s32 %s784, %s785
          %s787 = smul.addr %s786, 8
          %s788 = scalar_lea.vmem %s2, %s787
        $region56: #{tpu_custom_call.1} parent=51 // pred_fallthru
          _
        // Predicated region
        $region57: #{tpu_custom_call.1} parent=51 // pred_check
          %p789 = pneg %p144
        $region58: #{tpu_custom_call.1} parent=51 // pred_check_branch
          %791 = sbr.rel (%p789) target = $region60
        $region59: #{tpu_custom_call.1} parent=51 // pred_region
          %p792 = scmp.lt.s32.totalorder %s28, 1
          %s793 = scalar_select %p792, %s28, 1
          %p794 = scmp.lt.s32.totalorder %s29, 1
          %s795 = scalar_select %p794, %s29, 1
          %s796 = smul.addr %s793, 2
          %s797 = sadd.s32 %s795, %s796
          %s798 = smul.addr %s797, 8
          %s799 = scalar_lea.vmem %s3, %s798
        $region60: #{tpu_custom_call.1} parent=51 // pred_fallthru
          _
        // Predicated region
        $region61: #{tpu_custom_call.1} parent=51 // pred_check
          %p800 = pneg %p172
        $region62: #{tpu_custom_call.1} parent=51 // pred_check_branch
          %802 = sbr.rel (%p800) target = $region64
        $region63: #{tpu_custom_call.1} parent=51 // pred_region
          %p803 = scmp.lt.s32.totalorder %s28, 1
          %s804 = scalar_select %p803, %s28, 1
          %p805 = scmp.lt.s32.totalorder %s29, 1
          %s806 = scalar_select %p805, %s29, 1
          %s807 = smul.addr %s804, 2
          %s808 = sadd.s32 %s806, %s807
          %s809 = smul.addr %s808, 8
          %s810 = scalar_lea.vmem %s4, %s809
        $region64: #{tpu_custom_call.1} parent=51 // pred_fallthru
          _
      $region52: #{tpu_custom_call.1} parent=5 // pred_fallthru
        _
    $region6: #{tpu_custom_call.1} parent=1 // loop_footer
      %s21 = sadd.s32 1, %s17
    $region7: #{tpu_custom_call.1} parent=1 // loop_footer_branch
      %16 = sbr.rel target = $region3
    $region8: #{tpu_custom_call.1} parent=1 // loop_exit
      _
    %811 = vsyncpa [#allocation3], 1
    %s812 = scalar_lea.sflag [#allocation3], 1
    %813 = vsyncpa %s812, 1
    %814 = vsyncpa [#allocation5], 1
    %s815 = scalar_lea.sflag [#allocation5], 1
    %816 = vsyncpa %s815, 1

</llo_original>
